<compile_context>
chip_gen: v6e
topology: v6e:2x2x1
jax: 0.10.0
libtpu: 0.0.40
codegen_flags: <defaults>
</compile_context>

<pallas_src>
import functools

import jax
import jax.numpy as jnp
from jax.experimental import pallas as pl
from jax.experimental.pallas import tpu as pltpu

_LANES = 128


def _cdiv(a, b):
    return -(-a // b)


def _moments_kernel(s_ref, t_ref, y_ref, out_ref, *,
                    n_rows, tile_rows, blocks_per_core, acc_rows,
                    normalize_outputs, needs_mask):
    """Accumulates per-vreg partial moment sums into the resident out_ref."""
    c = pl.program_id(0)   # core-split axis ("parallel")
    i = pl.program_id(1)   # row-block axis ("arbitrary")

    @pl.when(i == 0)
    def _init():
        out_ref[...] = jnp.zeros_like(out_ref)

    s = s_ref[...].astype(jnp.float32)
    t = t_ref[...].astype(jnp.float32)
    y = y_ref[...].astype(jnp.float32)

    if needs_mask:
        # Mask rows past the true row count (partial last block and/or the
        # duplicated block read by the clamped index_map when the block count
        # does not split evenly across the core axis).
        g = c * blocks_per_core + i                  # logical global block idx
        valid = n_rows - g * tile_rows               # may be <= 0 or >= tile_rows
        rid = jax.lax.broadcasted_iota(jnp.int32, (tile_rows, _LANES), 0)
        m = rid < valid
        zero = jnp.float32(0.0)
        s = jnp.where(m, s, zero)
        t = jnp.where(m, t, zero)
        y = jnp.where(m, y, zero)

    def fold(x):
        # (tile_rows, 128) -> (acc_rows, 128) with VPU-only adds; the final
        # cross-lane/sublane reduction happens once, in JAX, on the partials.
        if tile_rows == acc_rows:
            return x
        return jnp.sum(x.reshape(tile_rows // acc_rows, acc_rows, _LANES), axis=0)

    if normalize_outputs:
        # Single-pass moments: zero padding / masked rows contribute nothing.
        out_ref[0] += fold(s)
        out_ref[1] += fold(t)
        out_ref[2] += fold(y)
        out_ref[3] += fold(s * s)
        out_ref[4] += fold(t * t)
        out_ref[5] += fold(y * y)
        out_ref[6] += fold(s * t)
        out_ref[7] += fold(s * y)
    else:
        d_sy = s - y
        d_st = s - t   # (s/T - t/T)^2 * T^2 == (s - t)^2 : temperature folds out
        out_ref[0] += fold(d_sy * d_sy)
        out_ref[1] += fold(d_st * d_st)


def _finalize(sums, *, n, alpha, normalize_outputs, eps):
    """Turns global moment sums into (total, task, distill) losses."""
    inv_n = jnp.float32(1.0 / n)
    if normalize_outputs:
        m_s = sums[0] * inv_n
        m_t = sums[1] * inv_n
        m_y = sums[2] * inv_n
        css_s = jnp.maximum(sums[3] - n * m_s * m_s, 0.0)   # centered sum sq
        css_t = jnp.maximum(sums[4] - n * m_t * m_t, 0.0)
        css_y = jnp.maximum(sums[5] - n * m_y * m_y, 0.0)
        ccp_st = sums[6] - n * m_s * m_t                     # centered cross
        ccp_sy = sums[7] - n * m_s * m_y
        # torch .std() is unbiased (ddof=1); eps added AFTER sqrt as in torch.
        # TODO(synk): torch yields NaN for n == 1; max(n-1,1) gives 0 var here.
        inv_nm1 = jnp.float32(1.0 / max(n - 1, 1))
        std_s = jnp.sqrt(css_s * inv_nm1) + eps
        std_t = jnp.sqrt(css_t * inv_nm1) + eps
        std_y = jnp.sqrt(css_y * inv_nm1) + eps
        task = (css_s / (std_s * std_s) + css_y / (std_y * std_y)
                - 2.0 * ccp_sy / (std_s * std_y)) * inv_n
        dist = (css_s / (std_s * std_s) + css_t / (std_t * std_t)
                - 2.0 * ccp_st / (std_s * std_t)) * inv_n
    else:
        task = sums[0] * inv_n
        dist = sums[1] * inv_n
    total = (1.0 - alpha) * task + alpha * dist
    return total, task, dist


def _jnp_distillation_loss(student, teacher, targets, *, alpha, temperature,
                           normalize_outputs, eps=1e-6):
    """Fused-jnp path (also serves as the reference)."""
    s = student.astype(jnp.float32)
    t = teacher.astype(jnp.float32)
    y = targets.astype(jnp.float32)

    def norm(x):
        if not normalize_outputs:
            return x
        mean = jnp.mean(x, axis=-1, keepdims=True)
        std = jnp.std(x, axis=-1, keepdims=True, ddof=1) + eps
        return (x - mean) / std

    s, t, y = norm(s), norm(t), norm(y)
    task = jnp.mean((s - y) ** 2)
    dist = jnp.mean((s / temperature - t / temperature) ** 2) * temperature ** 2
    total = (1.0 - alpha) * task + alpha * dist
    return total, task, dist


def distillation_loss(student_outputs, teacher_outputs, targets, *,
                      alpha=0.5, temperature=1.0, loss_type='mse',
                      normalize_outputs=False, huber_delta=1.0,
                      tile_rows=2048, use_pallas=None, eps=1e-6):
    """Returns (total_loss, task_loss, distill_loss) as f32 scalars."""
    assert student_outputs.shape == teacher_outputs.shape == targets.shape, (
        f'Shape mismatch: student={student_outputs.shape}, '
        f'teacher={teacher_outputs.shape}, targets={targets.shape}')
    if loss_type != 'mse':
        # TODO(synk): 'mae' and 'huber' branches not implemented in the kernel.
        raise NotImplementedError("only loss_type='mse' implemented")
    del huber_delta

    n = int(student_outputs.shape[0])
    if use_pallas is None:
        use_pallas = n >= 65536   # below this the kernel is pure launch overhead
    if not use_pallas:
        return _jnp_distillation_loss(student_outputs, teacher_outputs, targets,
                                      alpha=alpha, temperature=temperature,
                                      normalize_outputs=normalize_outputs, eps=eps)

    # ---- layout ------------------------------------------------------------
    R = _cdiv(n, _LANES)                 # rows of the (R, 128) view
    padded = R * _LANES
    itemsize = int(jnp.dtype(student_outputs.dtype).itemsize)
    sub_mult = max(8, 32 // max(itemsize, 1))   # 8 f32, 16 bf16, 32 for 8-bit

    if R <= sub_mult:
        tr = R                            # single (full-dims) block
    else:
        tr = min(int(tile_rows), R)
        tr = max(sub_mult, (tr // sub_mult) * sub_mult)
    acc_rows = 8 if tr % 8 == 0 else tr

    blocks_total = _cdiv(R, tr)
    ncores = 2 if blocks_total >= 2 else 1      # v7x: shard across both TCs
    bpc = _cdiv(blocks_total, ncores)           # row-blocks per core slice
    clamp_needed = ncores * bpc > blocks_total
    needs_mask = (blocks_total * tr != R) or clamp_needed

    def prep(x):
        x = x.reshape(-1)
        if padded != n:
            # TODO(synk): lane-unaligned n still materializes one padded copy;
            # n % 128 == 0 (the common large-B case) is fully zero-copy.
            x = jnp.pad(x, (0, padded - n))     # zeros add 0 to every sum
        return x.reshape(R, _LANES)             # free reshape when no pad

    s2d = prep(student_outputs)
    t2d = prep(teacher_outputs)
    y2d = prep(targets)

    num_acc = 8 if normalize_outputs else 2

    def in_index_map(c, i):
        g = c * bpc + i
        if clamp_needed:
            g = jnp.minimum(g, blocks_total - 1)   # keep DMA in bounds; masked
        return (g, 0)

    in_spec = pl.BlockSpec((tr, _LANES), in_index_map)
    out_spec = pl.BlockSpec((None, num_acc, acc_rows, _LANES),
                            lambda c, i: (c, 0, 0, 0))

    kernel = functools.partial(
        _moments_kernel,
        n_rows=R, tile_rows=tr, blocks_per_core=bpc, acc_rows=acc_rows,
        normalize_outputs=bool(normalize_outputs), needs_mask=bool(needs_mask))

    partials = pl.pallas_call(
        kernel,
        out_shape=jax.ShapeDtypeStruct((ncores, num_acc, acc_rows, _LANES),
                                       jnp.float32),
        grid=(ncores, bpc),
        in_specs=[in_spec, in_spec, in_spec],
        out_specs=out_spec,
        compiler_params=pltpu.CompilerParams(
            dimension_semantics=("parallel", "arbitrary")),
    )(s2d, t2d, y2d)

    sums = jnp.sum(partials, axis=(0, 2, 3))     # tiny XLA reduction
    return _finalize(sums, n=n, alpha=float(alpha),
                     normalize_outputs=bool(normalize_outputs), eps=float(eps))


if __name__ == "__main__":
    def check(got, want, atol, rtol):
        for g, w in zip(got, want):
            assert jnp.allclose(g, w, atol=atol, rtol=rtol), (g, w)

    # Case 1: tiny batch, default config; force the kernel (single (1,128) tile).
    k1, k2, k3 = jax.random.split(jax.random.PRNGKey(0), 3)
    b = 16
    s = jax.random.normal(k1, (b,), jnp.float32)
    t = jax.random.normal(k2, (b,), jnp.float32)
    y = jax.random.normal(k3, (b,), jnp.float32)
    got = distillation_loss(s, t, y, alpha=0.5, temperature=1.0,
                            normalize_outputs=False, use_pallas=True)
    jax.block_until_ready(got)
    want = _jnp_distillation_loss(s, t, y, alpha=0.5, temperature=1.0,
                                  normalize_outputs=False)
    check(got, want, 1e-5, 1e-5)

    # Case 2: multi-block grid + 2-way core split with a clamped/masked tail
    # block, normalized outputs, non-default alpha / temperature.
    k4, k5, k6 = jax.random.split(jax.random.PRNGKey(1), 3)
    b = 3000
    s = jax.random.normal(k4, (b,), jnp.float32)
    t = 0.8 * s + 0.3 * jax.random.normal(k5, (b,), jnp.float32)
    y = s + 0.5 * jax.random.normal(k6, (b,), jnp.float32)
    got = distillation_loss(s, t, y, alpha=0.3, temperature=2.0,
                            normalize_outputs=True, tile_rows=8, use_pallas=True)
    jax.block_until_ready(got)
    want = _jnp_distillation_loss(s, t, y, alpha=0.3, temperature=2.0,
                                  normalize_outputs=True)
    check(got, want, 1e-3, 1e-3)

    # Case 3: same data, unnormalized, temperature != 1 (folds out exactly).
    got = distillation_loss(s, t, y, alpha=0.7, temperature=3.0,
                            normalize_outputs=False, tile_rows=8, use_pallas=True)
    jax.block_until_ready(got)
    want = _jnp_distillation_loss(s, t, y, alpha=0.7, temperature=3.0,
                                  normalize_outputs=False)
    check(got, want, 1e-4, 1e-4)

    # Case 4: lane-aligned bf16 batch -> zero-copy prep (no pad) + in-kernel cast.
    k7, k8, k9 = jax.random.split(jax.random.PRNGKey(2), 3)
    b = 4096
    s = jax.random.normal(k7, (b,), jnp.float32).astype(jnp.bfloat16)
    t = jax.random.normal(k8, (b,), jnp.float32).astype(jnp.bfloat16)
    y = jax.random.normal(k9, (b,), jnp.float32).astype(jnp.bfloat16)
    got = distillation_loss(s, t, y, alpha=0.5, temperature=1.0,
                            normalize_outputs=True, use_pallas=True)
    jax.block_until_ready(got)
    want = _jnp_distillation_loss(s, t, y, alpha=0.5, temperature=1.0,
                                  normalize_outputs=True)
    check(got, want, 1e-3, 1e-3)

    # Case 5: small-B auto path (plain fused jnp, bypasses pallas_call).
    got = distillation_loss(s[:64], t[:64], y[:64])
    jax.block_until_ready(got)

    print("KERNEL_OK")
</pallas_src>

<mosaic_0001>
module attributes {stable_mosaic.version = 11 : i64} {
  func.func @_moments_kernel(%arg0: i32, %arg1: i32, %arg2: memref<1x128xf32, #tpu.memory_space<vmem>>, %arg3: memref<1x128xf32, #tpu.memory_space<vmem>>, %arg4: memref<1x128xf32, #tpu.memory_space<vmem>>, %arg5: memref<1x2x1x128xf32, #tpu.memory_space<vmem>>) attributes {dimension_semantics = [#tpu.dimension_semantics<parallel>, #tpu.dimension_semantics<arbitrary>], iteration_bounds = array<i64: 1, 1>, scalar_prefetch = 0 : i64, scratch_operands = 0 : i64, tpu.core_type = #tpu.core_type<tc>, window_params = [{transform_indices = @transform_0, window_bounds = array<i64: 1, 128>}, {transform_indices = @transform_1, window_bounds = array<i64: 1, 128>}, {transform_indices = @transform_2, window_bounds = array<i64: 1, 128>}, {transform_indices = @transform_3, window_bounds = array<i64: 1, 2, 1, 128>}]} {
    %c0_i32 = arith.constant 0 : i32
    %0 = arith.cmpi eq, %arg1, %c0_i32 : i32
    %1 = arith.extui %0 : i1 to i32
    %c0_i32_0 = arith.constant 0 : i32
    %2 = arith.cmpi ne, %1, %c0_i32_0 : i32
    scf.if %2 {
      %cst = arith.constant 0.000000e+00 : f32
      %22 = vector.broadcast %cst : f32 to vector<2x1x128xf32>
      %c0_21 = arith.constant 0 : index
      %c0_22 = arith.constant 0 : index
      %c0_23 = arith.constant 0 : index
      %c0_24 = arith.constant 0 : index
      %23 = vector.load %arg5[%c0_21, %c0_22, %c0_23, %c0_24] : memref<1x2x1x128xf32, #tpu.memory_space<vmem>>, vector<1x2x1x128xf32>
      %24 = vector.shape_cast %23 : vector<1x2x1x128xf32> to vector<2x1x128xf32>
      %25 = vector.shape_cast %22 : vector<2x1x128xf32> to vector<1x2x1x128xf32>
      tpu.vector_store %arg5[%c0_21, %c0_22, %c0_23, %c0_24], %25 {strides = array<i32>} : memref<1x2x1x128xf32, #tpu.memory_space<vmem>>, vector<1x2x1x128xf32>,
    } else {
    }
    %c0 = arith.constant 0 : index
    %c0_1 = arith.constant 0 : index
    %3 = vector.load %arg2[%c0, %c0_1] : memref<1x128xf32, #tpu.memory_space<vmem>>, vector<1x128xf32>
    %c0_2 = arith.constant 0 : index
    %c0_3 = arith.constant 0 : index
    %4 = vector.load %arg3[%c0_2, %c0_3] : memref<1x128xf32, #tpu.memory_space<vmem>>, vector<1x128xf32>
    %c0_4 = arith.constant 0 : index
    %c0_5 = arith.constant 0 : index
    %5 = vector.load %arg4[%c0_4, %c0_5] : memref<1x128xf32, #tpu.memory_space<vmem>>, vector<1x128xf32>
    %6 = arith.subf %3, %5 : vector<1x128xf32>
    %7 = arith.subf %3, %4 : vector<1x128xf32>
    %c0_6 = arith.constant 0 : index
    %c0_7 = arith.constant 0 : index
    %c0_8 = arith.constant 0 : index
    %c0_9 = arith.constant 0 : index
    %8 = vector.load %arg5[%c0_6, %c0_7, %c0_8, %c0_9] : memref<1x2x1x128xf32, #tpu.memory_space<vmem>>, vector<1x1x1x128xf32>
    %9 = vector.shape_cast %8 : vector<1x1x1x128xf32> to vector<1x128xf32>
    %10 = arith.mulf %6, %6 : vector<1x128xf32>
    %11 = arith.addf %9, %10 : vector<1x128xf32>
    %c0_10 = arith.constant 0 : index
    %c0_11 = arith.constant 0 : index
    %c0_12 = arith.constant 0 : index
    %c0_13 = arith.constant 0 : index
    %12 = vector.load %arg5[%c0_10, %c0_11, %c0_12, %c0_13] : memref<1x2x1x128xf32, #tpu.memory_space<vmem>>, vector<1x1x1x128xf32>
    %13 = vector.shape_cast %12 : vector<1x1x1x128xf32> to vector<1x128xf32>
    %14 = vector.shape_cast %11 : vector<1x128xf32> to vector<1x1x1x128xf32>
    tpu.vector_store %arg5[%c0_10, %c0_11, %c0_12, %c0_13], %14 {strides = array<i32>} : memref<1x2x1x128xf32, #tpu.memory_space<vmem>>, vector<1x1x1x128xf32>,
    %c0_14 = arith.constant 0 : index
    %c1 = arith.constant 1 : index
    %c0_15 = arith.constant 0 : index
    %c0_16 = arith.constant 0 : index
    %15 = vector.load %arg5[%c0_14, %c1, %c0_15, %c0_16] : memref<1x2x1x128xf32, #tpu.memory_space<vmem>>, vector<1x1x1x128xf32>
    %16 = vector.shape_cast %15 : vector<1x1x1x128xf32> to vector<1x128xf32>
    %17 = arith.mulf %7, %7 : vector<1x128xf32>
    %18 = arith.addf %16, %17 : vector<1x128xf32>
    %c0_17 = arith.constant 0 : index
    %c1_18 = arith.constant 1 : index
    %c0_19 = arith.constant 0 : index
    %c0_20 = arith.constant 0 : index
    %19 = vector.load %arg5[%c0_17, %c1_18, %c0_19, %c0_20] : memref<1x2x1x128xf32, #tpu.memory_space<vmem>>, vector<1x1x1x128xf32>
    %20 = vector.shape_cast %19 : vector<1x1x1x128xf32> to vector<1x128xf32>
    %21 = vector.shape_cast %18 : vector<1x128xf32> to vector<1x1x1x128xf32>
    tpu.vector_store %arg5[%c0_17, %c1_18, %c0_19, %c0_20], %21 {strides = array<i32>} : memref<1x2x1x128xf32, #tpu.memory_space<vmem>>, vector<1x1x1x128xf32>,
    return
  }
  func.func @transform_0(%arg0: i32, %arg1: i32) -> (i32, i32) {
    %c1_i32 = arith.constant 1 : i32
    %0 = arith.muli %arg0, %c1_i32 : i32
    %1 = arith.addi %0, %arg1 : i32
    %c0_i32 = arith.constant 0 : i32
    %c0_i32_0 = arith.constant 0 : i32
    return %1, %c0_i32 : i32, i32
  }
  func.func @transform_1(%arg0: i32, %arg1: i32) -> (i32, i32) {
    %c1_i32 = arith.constant 1 : i32
    %0 = arith.muli %arg0, %c1_i32 : i32
    %1 = arith.addi %0, %arg1 : i32
    %c0_i32 = arith.constant 0 : i32
    %c0_i32_0 = arith.constant 0 : i32
    return %1, %c0_i32 : i32, i32
  }
  func.func @transform_2(%arg0: i32, %arg1: i32) -> (i32, i32) {
    %c1_i32 = arith.constant 1 : i32
    %0 = arith.muli %arg0, %c1_i32 : i32
    %1 = arith.addi %0, %arg1 : i32
    %c0_i32 = arith.constant 0 : i32
    %c0_i32_0 = arith.constant 0 : i32
    return %1, %c0_i32 : i32, i32
  }
  func.func @transform_3(%arg0: i32, %arg1: i32) -> (i32, i32, i32, i32) {
    %c0_i32 = arith.constant 0 : i32
    %c0_i32_0 = arith.constant 0 : i32
    %c0_i32_1 = arith.constant 0 : i32
    %c0_i32_2 = arith.constant 0 : i32
    return %arg0, %c0_i32, %c0_i32_0, %c0_i32_1 : i32, i32, i32, i32
  }
}

</mosaic_0001>

<llo_original>
// kernel: tpu_custom_call.1
$region0: #{tpu_custom_call.1}
  #allocation0 [shape = 'u32[]', space=smem, size = 0x4, offset = 0x4, fixed_abs, tag = 'smem constant byte address 0x4 - core index']
  #allocation1 [shape = 'u32[144,128]{1,0:T(1,128)}', space=vmem, size = 0x12000, scoped, tag = 'internal scratch']
  %s0 = inlined_call_operand.hbm [shape: f32[1,128], index: 0, kind: input, shape index: {}]
  %s1 = inlined_call_operand.vmem [shape: f32[1,128], index: 1, kind: input, shape index: {}]
  %s2 = inlined_call_operand.vmem [shape: f32[1,128], index: 2, kind: input, shape index: {}]
  %s3 = inlined_call_operand.hbm [shape: f32[1,2,1,128], index: 3, kind: output, shape index: {}]
  %s4 = sld [smem:[#allocation0]]
  $region30: #{tpu_custom_call.1} parent=0
    _
  %s6 = ssub.s32 1, %s4
  %s7 = scalar_select 0, %s6, %s4
  $region1: #{tpu_custom_call.1} parent=0
    #allocation2 [shape = 'u8[512]{0}', space=vmem, size = 0x400, scoped, tag = 'input window, operand 0, single buffered']
    #allocation3 [shape = 's32[1]{0}', space=sflag, size = 0x4, scoped, tag = 'scoped memory for tpu_custom_call.1']
    #allocation4 [shape = 's32[1]{0}', space=sflag, size = 0x4, scoped, tag = 'scoped memory for tpu_custom_call.1']
    #allocation5 [shape = 'u8[1024]{0}', space=vmem, size = 0x400, scoped, tag = 'output window, operand 0, single buffered']
    %8 = vsyncpa [#allocation3], 0
    %9 = vsyncpa [#allocation4], 0
    // Predicated region
    $region2: #{tpu_custom_call.1} parent=1 // pred_check
      _
    $region3: #{tpu_custom_call.1} parent=1 // pred_check_branch
      %11 = sbr.rel (0) target = $region5
    $region4: #{tpu_custom_call.1} parent=1 // pred_region
      %s12 = sadd.s32 0, 0
      %s14 = ssub.s32 16, 16
      %15 = vsyncadd [#allocation3], %s14
      %s16 = smul.addr %s12, 16
      %s17 = scalar_lea.hbm %s0, %s16
      %s19 = sshll.u32 [#allocation2], 4
      %s20 = int_to_ptr.vmem [resolvable:$true] %s19
      %22 = dma.hbm_to_vmem [thread:$0]  %s17, 16, %s20, [#allocation3]
    $region5: #{tpu_custom_call.1} parent=1 // pred_fallthru
      _
    // Predicated region
    $region6: #{tpu_custom_call.1} parent=1 // pred_check
      _
    $region7: #{tpu_custom_call.1} parent=1 // pred_check_branch
      %24 = sbr.rel (0) target = $region9
    $region8: #{tpu_custom_call.1} parent=1 // pred_region
      %s25 = sadd.s32 0, 0
      %p26 = scmp.lt.s32.totalorder %s25, 0
      %s27 = scalar_select %p26, %s25, 0
      %s28 = scalar_lea.vmem %s1, %s27
      %s29 = sadd.s32 0, 0
    $region9: #{tpu_custom_call.1} parent=1 // pred_fallthru
      _
    // Predicated region
    $region10: #{tpu_custom_call.1} parent=1 // pred_check
      _
    $region11: #{tpu_custom_call.1} parent=1 // pred_check_branch
      %31 = sbr.rel (0) target = $region13
    $region12: #{tpu_custom_call.1} parent=1 // pred_region
      %s32 = sadd.s32 0, 0
      %p33 = scmp.lt.s32.totalorder %s32, 0
      %s34 = scalar_select %p33, %s32, 0
      %s35 = scalar_lea.vmem %s2, %s34
      %s36 = sadd.s32 0, 0
    $region13: #{tpu_custom_call.1} parent=1 // pred_fallthru
      _
    // Predicated region
    $region14: #{tpu_custom_call.1} parent=1 // pred_check
      _
    $region15: #{tpu_custom_call.1} parent=1 // pred_check_branch
      %38 = sbr.rel (0) target = $region17
    $region16: #{tpu_custom_call.1} parent=1 // pred_region
      %39 = dma.done [#allocation3], 16
    $region17: #{tpu_custom_call.1} parent=1 // pred_fallthru
      _
    %s40 = sadd.s32 0, 0
    %p41 = scmp.lt.s32.totalorder %s40, 0
    %s42 = scalar_select %p41, %s40, 0
    %s43 = scalar_lea.vmem %s1, %s42
    %s44 = sadd.s32 0, 0
    %p45 = scmp.lt.s32.totalorder %s44, 0
    %s46 = scalar_select %p45, %s44, 0
    %s47 = scalar_lea.vmem %s2, %s46
    %s48 = sadd.s32 0, 0
    %s49 = sadd.s32 0, 0
    %p50 = scmp.lt.s32.totalorder %s49, 0
    %s51 = scalar_select %p50, %s49, 0
    %s52 = scalar_lea.vmem %s1, %s51
    %s53 = sadd.s32 0, 0
    %s54 = sadd.s32 0, 0
    %p55 = scmp.lt.s32.totalorder %s54, 0
    %s56 = scalar_select %p55, %s54, 0
    %s57 = scalar_lea.vmem %s2, %s56
    %s58 = sadd.s32 0, 0
    %p59 = scmp.eq.s32.totalorder 0, 0
    // Predicated region
    $region18: #{tpu_custom_call.1} parent=1 // pred_check
      %p60 = pneg %p59
    $region19: #{tpu_custom_call.1} parent=1 // pred_check_branch
      %62 = sbr.rel (%p60) target = $region21
    $region20: #{tpu_custom_call.1} parent=1 // pred_region
      %63 = vst [vmem:[#allocation5] sm:$0x1] 0.0
      %64 = vst [vmem:[#allocation5 + $0x1] sm:$0x1] 0.0
    $region21: #{tpu_custom_call.1} parent=1 // pred_fallthru
      _
    %v65 = vld [vmem:[#allocation2] sm:$0x1]
    %v66 = vld [vmem:[%s52] sm:$0x1]
    %v67 = vld [vmem:[%s57] sm:$0x1]
    %v68 = vsub.f32 %v65, %v67
    %v69 = vsub.f32 %v65, %v66
    %v70 = vld [vmem:[#allocation5] sm:$0x1]
    %v71 = vmul.f32 %v68, %v68
    %v72 = vadd.f32 %v70, %v71
    %73 = vst [vmem:[#allocation5] sm:$0x1] %v72
    %s74 = scalar_lea.vmem [#allocation5], 1
    %v75 = vld [vmem:[%s74] sm:$0x1]
    %v76 = vmul.f32 %v69, %v69
    %v77 = vadd.f32 %v75, %v76
    %78 = vst [vmem:[%s74] sm:$0x1] %v77
    // Predicated region
    $region22: #{tpu_custom_call.1} parent=1 // pred_check
      _
    $region23: #{tpu_custom_call.1} parent=1 // pred_check_branch
      %80 = sbr.rel (0) target = $region25
    $region24: #{tpu_custom_call.1} parent=1 // pred_region
      %s82 = ssub.s32 32, 32
      %83 = vsyncadd [#allocation4], %s82
      %s84 = sshll.u32 [#allocation5], 4
      %s85 = int_to_ptr.vmem [resolvable:$true] %s84
      %90 = dma.vmem_to_hbm [thread:$0]  %s85, 32, %s3, [#allocation4], 16, 16, 1
    $region25: #{tpu_custom_call.1} parent=1 // pred_fallthru
      _
    // Predicated region
    $region26: #{tpu_custom_call.1} parent=1 // pred_check
      _
    $region27: #{tpu_custom_call.1} parent=1 // pred_check_branch
      %92 = sbr.rel (0) target = $region29
    $region28: #{tpu_custom_call.1} parent=1 // pred_region
      %93 = dma.done [#allocation4], 32
    $region29: #{tpu_custom_call.1} parent=1 // pred_fallthru
      _
    %94 = vsyncpa [#allocation3], 1
    %95 = vsyncpa [#allocation4], 1

</llo_original>
